<compile_context>
chip_gen: v7x
topology: tpu7x:2x2x1
jax: 0.10.0
libtpu: 0.0.40
codegen_flags: <defaults>
</compile_context>

<pallas_src>
import jax
import jax.numpy as jnp
from jax.experimental import pallas as pl
from jax.experimental.pallas import tpu as pltpu


VERTICAL_SCALING = 1.0
HORIZONTAL_SCALING = 100.0
VERTICAL_SHIFT = 2.0


def _round_up(x: int, m: int) -> int:
    return ((x + m - 1) // m) * m


def actor_kernel(x_ref, w1_ref, b1_ref, w2_ref, b2_ref, w3_ref, b3_ref, o_ref):
    # x arrives in its HBM dtype (f32); cast to bf16 here (VPU has slack).
    # The 1/horizontal_scaling input scale is already folded into w1.
    x = x_ref[...].astype(jnp.bfloat16)

    # Layer 1: Linear + ReLU (bf16 MXU matmul, f32 accumulation)
    h = jnp.dot(x, w1_ref[...], preferred_element_type=jnp.float32) + b1_ref[...]
    h = jnp.maximum(h, 0.0)

    # Layer 2: Linear + ReLU
    h = jnp.dot(h.astype(jnp.bfloat16), w2_ref[...],
                preferred_element_type=jnp.float32) + b2_ref[...]
    h = jnp.maximum(h, 0.0)

    # Layer 3: Linear + Tanh (tanh -> EUP)
    h = jnp.dot(h.astype(jnp.bfloat16), w3_ref[...],
                preferred_element_type=jnp.float32) + b3_ref[...]
    h = jnp.tanh(h)

    # result = vertical_shift + vertical_scaling * net(...); skip the multiply
    # at trace time when the scale is exactly 1.0.
    if VERTICAL_SCALING != 1.0:
        h = VERTICAL_SCALING * h
    o_ref[...] = (h + VERTICAL_SHIFT).astype(o_ref.dtype)


def _pick_batch_tile(padded_batch: int, tb_max: int) -> int:
    """Largest sensible batch tile; even grid length when multi-tile (v7x)."""
    if padded_batch <= tb_max:
        return padded_batch                      # single exact-fit tile
    steps = pl.cdiv(padded_batch, tb_max)
    if steps % 2 == 1:
        steps += 1                               # even grid -> balanced dual-TC split
    return _round_up(pl.cdiv(padded_batch, steps), 16)


def actor_forward(x, kernel_params, *, tb_max=2048):
    """x: (batch, obs_size) f32/bf16.  kernel_params from prepare_kernel_params."""
    w1, b1 = kernel_params["w1"], kernel_params["b1"]
    w2, b2 = kernel_params["w2"], kernel_params["b2"]
    w3, b3 = kernel_params["w3"], kernel_params["b3"]

    batch, obs = x.shape
    hidden = w1.shape[1]
    num_actions = w3.shape[1]

    # Only pad when the batch is not 8-row (sublane) aligned; usual batches
    # take the zero-copy path.
    padded_batch = _round_up(batch, 8)
    if padded_batch != batch:
        x = jnp.pad(x, ((0, padded_batch - batch), (0, 0)))

    tb = _pick_batch_tile(padded_batch, tb_max)
    grid = (pl.cdiv(padded_batch, tb),)

    # Weights / biases: single full-array blocks, VMEM-resident across the grid.
    resident = lambda a: pl.BlockSpec(a.shape, lambda i: (0,) * a.ndim)

    flops = 2 * padded_batch * (obs * hidden + hidden * hidden + hidden * num_actions)
    transcendentals = padded_batch * num_actions
    bytes_accessed = (
        padded_batch * obs * x.dtype.itemsize                          # x stream
        + (obs * hidden + hidden * hidden + hidden * num_actions) * 2  # bf16 weights
        + (hidden + hidden + num_actions) * 4                          # f32 biases
        + padded_batch * num_actions * 4                               # f32 output
    )

    out = pl.pallas_call(
        actor_kernel,
        out_shape=jax.ShapeDtypeStruct((padded_batch, num_actions), jnp.float32),
        grid=grid,
        in_specs=[
            pl.BlockSpec((tb, obs), lambda i: (i, 0)),   # streamed activations
            resident(w1), resident(b1),
            resident(w2), resident(b2),
            resident(w3), resident(b3),
        ],
        out_specs=pl.BlockSpec((tb, num_actions), lambda i: (i, 0)),
        compiler_params=pltpu.CompilerParams(
            dimension_semantics=("parallel",),           # dual-TC sharding on v7x
            vmem_limit_bytes=48 * 1024 * 1024,           # headroom for large tiles
        ),
        cost_estimate=pl.CostEstimate(
            flops=flops,
            transcendentals=transcendentals,
            bytes_accessed=bytes_accessed,
        ),
    )(x, w1, b1, w2, b2, w3, b3)

    if padded_batch != batch:
        out = out[:batch]
    return out


def init_params(key, obs_size, hidden_size, num_actions):
    """Deterministic PyTorch-style (Kaiming-uniform-ish) init, f32, unscaled."""
    ks = jax.random.split(key, 6)

    def linear(kw, kb, fan_in, fan_out):
        bound = 1.0 / jnp.sqrt(fan_in)
        w = jax.random.uniform(kw, (fan_in, fan_out), jnp.float32, -bound, bound)
        b = jax.random.uniform(kb, (1, fan_out), jnp.float32, -bound, bound)
        return w, b

    w1, b1 = linear(ks[0], ks[1], obs_size, hidden_size)
    w2, b2 = linear(ks[2], ks[3], hidden_size, hidden_size)
    w3, b3 = linear(ks[4], ks[5], hidden_size, num_actions)
    return {"w1": w1, "b1": b1, "w2": w2, "b2": b2, "w3": w3, "b3": b3}


def prepare_kernel_params(params):
    """Fold the input scale into w1 and cast weight matrices to bf16.

    Biases stay f32 (they add into the f32 accumulator)."""
    return {
        "w1": (params["w1"] / HORIZONTAL_SCALING).astype(jnp.bfloat16),
        "b1": params["b1"].astype(jnp.float32),
        "w2": params["w2"].astype(jnp.bfloat16),
        "b2": params["b2"].astype(jnp.float32),
        "w3": params["w3"].astype(jnp.bfloat16),
        "b3": params["b3"].astype(jnp.float32),
    }


def actor_reference(x, params):
    """Pure-JAX f32 reference matching the PyTorch module exactly."""
    h = x / HORIZONTAL_SCALING
    h = jnp.maximum(h @ params["w1"] + params["b1"], 0.0)
    h = jnp.maximum(h @ params["w2"] + params["b2"], 0.0)
    h = jnp.tanh(h @ params["w3"] + params["b3"])
    return VERTICAL_SHIFT + VERTICAL_SCALING * h


if __name__ == "__main__":
    obs_size, hidden_size, num_actions = 16, 32, 8
    batch = 2

    key = jax.random.PRNGKey(0)
    k_params, k_x = jax.random.split(key)
    params = init_params(k_params, obs_size, hidden_size, num_actions)
    kernel_params = prepare_kernel_params(params)
    x = jax.random.normal(k_x, (batch, obs_size), jnp.float32) * 50.0

    out = actor_forward(x, kernel_params)
    out = jax.block_until_ready(out)

    ref = actor_reference(x, params)
    assert out.shape == (batch, num_actions)
    # bf16 weights/activations -> looser tolerance; accumulation stays f32.
    assert jnp.allclose(out, ref, atol=5e-2, rtol=5e-2), "mismatch vs reference"

    print("KERNEL_OK")
</pallas_src>

<mosaic_0001>
module attributes {stable_mosaic.version = 11 : i64} {
  func.func @actor_kernel(%arg0: i32, %arg1: memref<8x16xf32, #tpu.memory_space<vmem>>, %arg2: memref<16x32xbf16, #tpu.memory_space<vmem>>, %arg3: memref<1x32xf32, #tpu.memory_space<vmem>>, %arg4: memref<32x32xbf16, #tpu.memory_space<vmem>>, %arg5: memref<1x32xf32, #tpu.memory_space<vmem>>, %arg6: memref<32x8xbf16, #tpu.memory_space<vmem>>, %arg7: memref<1x8xf32, #tpu.memory_space<vmem>>, %arg8: memref<8x8xf32, #tpu.memory_space<vmem>>) attributes {dimension_semantics = [#tpu.dimension_semantics<parallel>], iteration_bounds = array<i64: 1>, scalar_prefetch = 0 : i64, scratch_operands = 0 : i64, tpu.core_type = #tpu.core_type<tc>, window_params = [{transform_indices = @transform_0, window_bounds = array<i64: 8, 16>}, {pipeline_mode = #tpu.pipeline_mode<synchronous>, transform_indices = @transform_1, window_bounds = array<i64: 16, 32>}, {pipeline_mode = #tpu.pipeline_mode<synchronous>, transform_indices = @transform_2, window_bounds = array<i64: 1, 32>}, {pipeline_mode = #tpu.pipeline_mode<synchronous>, transform_indices = @transform_3, window_bounds = array<i64: 32, 32>}, {pipeline_mode = #tpu.pipeline_mode<synchronous>, transform_indices = @transform_4, window_bounds = array<i64: 1, 32>}, {pipeline_mode = #tpu.pipeline_mode<synchronous>, transform_indices = @transform_5, window_bounds = array<i64: 32, 8>}, {pipeline_mode = #tpu.pipeline_mode<synchronous>, transform_indices = @transform_6, window_bounds = array<i64: 1, 8>}, {transform_indices = @transform_7, window_bounds = array<i64: 8, 8>}]} {
    %c0 = arith.constant 0 : index
    %c0_0 = arith.constant 0 : index
    %0 = vector.load %arg1[%c0, %c0_0] : memref<8x16xf32, #tpu.memory_space<vmem>>, vector<8x16xf32>
    %1 = arith.truncf %0 : vector<8x16xf32> to vector<8x16xbf16>
    %c0_1 = arith.constant 0 : index
    %c0_2 = arith.constant 0 : index
    %2 = vector.load %arg2[%c0_1, %c0_2] : memref<16x32xbf16, #tpu.memory_space<vmem>>, vector<16x32xbf16>
    %cst = arith.constant dense<0.000000e+00> : vector<8x32xf32>
    %3 = tpu.matmul %1, %2, %cst {dimension_numbers = #tpu.dot_dimension_numbers<[1], [0], [0], [1], [0, 0, 1, 1], [], []>} : vector<8x16xbf16>, vector<16x32xbf16>, vector<8x32xf32> -> vector<8x32xf32>
    %c0_3 = arith.constant 0 : index
    %c0_4 = arith.constant 0 : index
    %4 = vector.load %arg3[%c0_3, %c0_4] : memref<1x32xf32, #tpu.memory_space<vmem>>, vector<1x32xf32>
    %5 = vector.broadcast %4 : vector<1x32xf32> to vector<8x32xf32>
    %6 = arith.addf %3, %5 : vector<8x32xf32>
    %cst_5 = arith.constant 0.000000e+00 : f32
    %7 = vector.broadcast %cst_5 : f32 to vector<8x32xf32>
    %8 = arith.maximumf %6, %7 : vector<8x32xf32>
    %9 = arith.truncf %8 : vector<8x32xf32> to vector<8x32xbf16>
    %c0_6 = arith.constant 0 : index
    %c0_7 = arith.constant 0 : index
    %10 = vector.load %arg4[%c0_6, %c0_7] : memref<32x32xbf16, #tpu.memory_space<vmem>>, vector<32x32xbf16>
    %cst_8 = arith.constant dense<0.000000e+00> : vector<8x32xf32>
    %11 = tpu.matmul %9, %10, %cst_8 {dimension_numbers = #tpu.dot_dimension_numbers<[1], [0], [0], [1], [0, 0, 1, 1], [], []>} : vector<8x32xbf16>, vector<32x32xbf16>, vector<8x32xf32> -> vector<8x32xf32>
    %c0_9 = arith.constant 0 : index
    %c0_10 = arith.constant 0 : index
    %12 = vector.load %arg5[%c0_9, %c0_10] : memref<1x32xf32, #tpu.memory_space<vmem>>, vector<1x32xf32>
    %13 = vector.broadcast %12 : vector<1x32xf32> to vector<8x32xf32>
    %14 = arith.addf %11, %13 : vector<8x32xf32>
    %cst_11 = arith.constant 0.000000e+00 : f32
    %15 = vector.broadcast %cst_11 : f32 to vector<8x32xf32>
    %16 = arith.maximumf %14, %15 : vector<8x32xf32>
    %17 = arith.truncf %16 : vector<8x32xf32> to vector<8x32xbf16>
    %c0_12 = arith.constant 0 : index
    %c0_13 = arith.constant 0 : index
    %18 = vector.load %arg6[%c0_12, %c0_13] : memref<32x8xbf16, #tpu.memory_space<vmem>>, vector<32x8xbf16>
    %cst_14 = arith.constant dense<0.000000e+00> : vector<8x8xf32>
    %19 = tpu.matmul %17, %18, %cst_14 {dimension_numbers = #tpu.dot_dimension_numbers<[1], [0], [0], [1], [0, 0, 1, 1], [], []>} : vector<8x32xbf16>, vector<32x8xbf16>, vector<8x8xf32> -> vector<8x8xf32>
    %c0_15 = arith.constant 0 : index
    %c0_16 = arith.constant 0 : index
    %20 = vector.load %arg7[%c0_15, %c0_16] : memref<1x8xf32, #tpu.memory_space<vmem>>, vector<1x8xf32>
    %21 = vector.broadcast %20 : vector<1x8xf32> to vector<8x8xf32>
    %22 = arith.addf %19, %21 : vector<8x8xf32>
    %23 = math.tanh %22 : vector<8x8xf32>
    %cst_17 = arith.constant 2.000000e+00 : f32
    %24 = vector.broadcast %cst_17 : f32 to vector<8x8xf32>
    %25 = arith.addf %23, %24 : vector<8x8xf32>
    %c0_18 = arith.constant 0 : index
    %c0_19 = arith.constant 0 : index
    %26 = vector.load %arg8[%c0_18, %c0_19] : memref<8x8xf32, #tpu.memory_space<vmem>>, vector<8x8xf32>
    tpu.vector_store %arg8[%c0_18, %c0_19], %25 {strides = array<i32>} : memref<8x8xf32, #tpu.memory_space<vmem>>, vector<8x8xf32>,
    return
  }
  func.func @transform_0(%arg0: i32) -> (i32, i32) {
    %c0_i32 = arith.constant 0 : i32
    %c0_i32_0 = arith.constant 0 : i32
    return %arg0, %c0_i32 : i32, i32
  }
  func.func @transform_1(%arg0: i32) -> (i32, i32) {
    %c0_i32 = arith.constant 0 : i32
    %c0_i32_0 = arith.constant 0 : i32
    %c0_i32_1 = arith.constant 0 : i32
    return %c0_i32, %c0_i32_0 : i32, i32
  }
  func.func @transform_2(%arg0: i32) -> (i32, i32) {
    %c0_i32 = arith.constant 0 : i32
    %c0_i32_0 = arith.constant 0 : i32
    %c0_i32_1 = arith.constant 0 : i32
    return %c0_i32, %c0_i32_0 : i32, i32
  }
  func.func @transform_3(%arg0: i32) -> (i32, i32) {
    %c0_i32 = arith.constant 0 : i32
    %c0_i32_0 = arith.constant 0 : i32
    %c0_i32_1 = arith.constant 0 : i32
    return %c0_i32, %c0_i32_0 : i32, i32
  }
  func.func @transform_4(%arg0: i32) -> (i32, i32) {
    %c0_i32 = arith.constant 0 : i32
    %c0_i32_0 = arith.constant 0 : i32
    %c0_i32_1 = arith.constant 0 : i32
    return %c0_i32, %c0_i32_0 : i32, i32
  }
  func.func @transform_5(%arg0: i32) -> (i32, i32) {
    %c0_i32 = arith.constant 0 : i32
    %c0_i32_0 = arith.constant 0 : i32
    %c0_i32_1 = arith.constant 0 : i32
    return %c0_i32, %c0_i32_0 : i32, i32
  }
  func.func @transform_6(%arg0: i32) -> (i32, i32) {
    %c0_i32 = arith.constant 0 : i32
    %c0_i32_0 = arith.constant 0 : i32
    %c0_i32_1 = arith.constant 0 : i32
    return %c0_i32, %c0_i32_0 : i32, i32
  }
  func.func @transform_7(%arg0: i32) -> (i32, i32) {
    %c0_i32 = arith.constant 0 : i32
    %c0_i32_0 = arith.constant 0 : i32
    return %arg0, %c0_i32 : i32, i32
  }
}

</mosaic_0001>

<llo_original>
// kernel: tpu_custom_call.1
$region0: #{tpu_custom_call.1}
  #allocation0 [shape = 'u32[]', space=smem, size = 0x4, offset = 0x4, fixed_abs, tag = 'smem constant byte address 0x4 - core index']
  #allocation1 [shape = 'u32[144,128]{1,0:T(1,128)}', space=vmem, size = 0x12000, scoped, tag = 'internal scratch']
  %s0 = inlined_call_operand.vmem [shape: f32[8,16], index: 0, kind: input, shape index: {}]
  %s1 = inlined_call_operand.hbm [shape: bf16[16,32], index: 1, kind: input, shape index: {}]
  %s2 = inlined_call_operand.vmem [shape: f32[1,32], index: 2, kind: input, shape index: {}]
  %s3 = inlined_call_operand.vmem [shape: bf16[32,32], index: 3, kind: input, shape index: {}]
  %s4 = inlined_call_operand.vmem [shape: f32[1,32], index: 4, kind: input, shape index: {}]
  %s5 = inlined_call_operand.vmem [shape: bf16[32,8], index: 5, kind: input, shape index: {}]
  %s6 = inlined_call_operand.vmem [shape: f32[1,8], index: 6, kind: input, shape index: {}]
  %s7 = inlined_call_operand.hbm [shape: f32[8,8], index: 7, kind: output, shape index: {}]
  %s8 = sld [smem:[#allocation0]]
  $region42: #{tpu_custom_call.1} parent=0
    _
  %s10 = ssub.s32 1, %s8
  %s11 = scalar_select 0, %s10, %s8
  $region1: #{tpu_custom_call.1} parent=0
    #allocation2 [shape = 'u8[4096]{0}', space=vmem, size = 0x1000, scoped, tag = 'input window, operand 1, single buffered']
    #allocation3 [shape = 's32[1]{0}', space=sflag, size = 0x4, scoped, tag = 'scoped memory for tpu_custom_call.1']
    #allocation4 [shape = 's32[1]{0}', space=sflag, size = 0x4, scoped, tag = 'scoped memory for tpu_custom_call.1']
    #allocation5 [shape = 'u8[4096]{0}', space=vmem, size = 0x1000, scoped, tag = 'output window, operand 0, single buffered']
    %12 = vsyncpa [#allocation3], 0
    %13 = vsyncpa [#allocation4], 0
    // Predicated region
    $region2: #{tpu_custom_call.1} parent=1 // pred_check
      _
    $region3: #{tpu_custom_call.1} parent=1 // pred_check_branch
      %15 = sbr.rel (0) target = $region5
    $region4: #{tpu_custom_call.1} parent=1 // pred_region
      _
    $region5: #{tpu_custom_call.1} parent=1 // pred_fallthru
      _
    // Predicated region
    $region6: #{tpu_custom_call.1} parent=1 // pred_check
      _
    $region7: #{tpu_custom_call.1} parent=1 // pred_check_branch
      %17 = sbr.rel (0) target = $region9
    $region8: #{tpu_custom_call.1} parent=1 // pred_region
      %s19 = ssub.s32 128, 128
      %20 = vsyncadd [#allocation3], %s19
      %s21 = sshll.u32 [#allocation2], 4
      %s22 = int_to_ptr.vmem [resolvable:$true] %s21
      %27 = dma.hbm_to_vmem [thread:$0]  %s1, 128, %s22, [#allocation3], 64, 64, 4
    $region9: #{tpu_custom_call.1} parent=1 // pred_fallthru
      _
    // Predicated region
    $region10: #{tpu_custom_call.1} parent=1 // pred_check
      _
    $region11: #{tpu_custom_call.1} parent=1 // pred_check_branch
      %29 = sbr.rel (0) target = $region13
    $region12: #{tpu_custom_call.1} parent=1 // pred_region
      _
    $region13: #{tpu_custom_call.1} parent=1 // pred_fallthru
      _
    // Predicated region
    $region14: #{tpu_custom_call.1} parent=1 // pred_check
      _
    $region15: #{tpu_custom_call.1} parent=1 // pred_check_branch
      %31 = sbr.rel (0) target = $region17
    $region16: #{tpu_custom_call.1} parent=1 // pred_region
      _
    $region17: #{tpu_custom_call.1} parent=1 // pred_fallthru
      _
    // Predicated region
    $region18: #{tpu_custom_call.1} parent=1 // pred_check
      _
    $region19: #{tpu_custom_call.1} parent=1 // pred_check_branch
      %33 = sbr.rel (0) target = $region21
    $region20: #{tpu_custom_call.1} parent=1 // pred_region
      _
    $region21: #{tpu_custom_call.1} parent=1 // pred_fallthru
      _
    // Predicated region
    $region22: #{tpu_custom_call.1} parent=1 // pred_check
      _
    $region23: #{tpu_custom_call.1} parent=1 // pred_check_branch
      %35 = sbr.rel (0) target = $region25
    $region24: #{tpu_custom_call.1} parent=1 // pred_region
      _
    $region25: #{tpu_custom_call.1} parent=1 // pred_fallthru
      _
    // Predicated region
    $region26: #{tpu_custom_call.1} parent=1 // pred_check
      _
    $region27: #{tpu_custom_call.1} parent=1 // pred_check_branch
      %37 = sbr.rel (0) target = $region29
    $region28: #{tpu_custom_call.1} parent=1 // pred_region
      _
    $region29: #{tpu_custom_call.1} parent=1 // pred_fallthru
      _
    // Predicated region
    $region30: #{tpu_custom_call.1} parent=1 // pred_check
      _
    $region31: #{tpu_custom_call.1} parent=1 // pred_check_branch
      %39 = sbr.rel (0) target = $region33
    $region32: #{tpu_custom_call.1} parent=1 // pred_region
      %40 = dma.done [#allocation3], 128
    $region33: #{tpu_custom_call.1} parent=1 // pred_fallthru
      _
    %v42 = vld [vmem:[%s0] sm:$0xff]
    %v43 = vpack.c.bf16 %v42, %v42
    %v44 = vld [vmem:[#allocation2] sm:$0xf]
    %v45 = vld [vmem:[#allocation2 + $0x4] sm:$0xf]
    %v46 = vld [vmem:[%s2] sm:$0x1]
    %v48 = vlaneseq
    %v49 = vshrl.u32 %v48, 7
    %v50 = vsub.s32 0, %v49
    %v51 = vrot.slane %v46, %v50
    %v55 = vunpack.c.l.b16 %v44
    %v56 = vunpack.c.l.b16 %v45
    %v57 = vpack.c.b16 %v56, %v55
    %vm59 = vcmask 130048
    %v61 = vsel %vm59, %v43, 0
    %63 = vmatprep.subr.bf16.mxu0 0
    %64 = vmatpush1.bf16.msra.mxu0 %v57
    %65 = vmatprep.subr.bf16.mxu0 0
    %66 = vmatpush1.bf16.msra.mxu0 0
    %67 = vmatprep.subr.bf16.mxu0 0
    %68 = vmatpush1.bf16.msra.mxu0 0
    %69 = vmatprep.subr.bf16.mxu0 0
    %70 = vmatpush1.bf16.msra.mxu0 0
    %71 = vmatprep.subr.bf16.mxu0 0
    %72 = vmatpush1.bf16.msra.mxu0 0
    %73 = vmatprep.subr.bf16.mxu0 0
    %74 = vmatpush1.bf16.msra.mxu0 0
    %75 = vmatprep.subr.bf16.mxu0 0
    %76 = vmatpush1.bf16.msra.mxu0 0
    %77 = vmatprep.subr.bf16.mxu0 0
    %78 = vmatpush1.bf16.msra.mxu0 0
    %79 = vmatprep.subr.bf16.mxu0 0
    %80 = vmatpush1.bf16.msra.mxu0 0
    %81 = vmatprep.subr.bf16.mxu0 0
    %82 = vmatpush1.bf16.msra.mxu0 0
    %83 = vmatprep.subr.bf16.mxu0 0
    %84 = vmatpush1.bf16.msra.mxu0 0
    %85 = vmatprep.subr.bf16.mxu0 0
    %86 = vmatpush1.bf16.msra.mxu0 0
    %87 = vmatprep.subr.bf16.mxu0 0
    %88 = vmatpush1.bf16.msra.mxu0 0
    %89 = vmatprep.subr.bf16.mxu0 0
    %90 = vmatpush1.bf16.msra.mxu0 0
    %91 = vmatprep.subr.bf16.mxu0 0
    %92 = vmatpush1.bf16.msra.mxu0 0
    %93 = vmatprep.subr.bf16.mxu0 0
    %94 = vmatpush1.bf16.msra.mxu0 0
    %95 = vmatprep.mubr.bf16.mxu0 0
    %96 = vmatmul.mubr.bf16.gmra.mrb[0].mxu0 %v61
    %v97 = vpop.f32.mrb[0].mxu0
    %v98 = vadd.f32 %v51, %v97
    %v99 = vpop.f32.mrb[0].mxu0
    %v100 = vpop.f32.mrb[0].mxu0
    %v101 = vpop.f32.mrb[0].mxu0
    %102 = vdwg.mxu0
    %v103 = vmax.f32 %v98, 0.0
    %v104 = vpack.c.bf16 %v103, %v103
    %v105 = vld [vmem:[%s3] sm:$0xf]
    %v106 = vld [vmem:[%s3 + $0x4] sm:$0xf]
    %v107 = vld [vmem:[%s3 + $0x8] sm:$0xf]
    %v108 = vld [vmem:[%s3 + $0xc] sm:$0xf]
    %v109 = vld [vmem:[%s4] sm:$0x1]
    %v111 = vlaneseq
    %v112 = vshrl.u32 %v111, 7
    %v113 = vsub.s32 0, %v112
    %v114 = vrot.slane %v109, %v113
    %v120 = vunpack.c.l.b16 %v105
    %v121 = vunpack.c.l.b16 %v106
    %v122 = vunpack.c.l.b16 %v107
    %v123 = vunpack.c.l.b16 %v108
    %v124 = vpack.c.b16 %v121, %v120
    %v125 = vpack.c.b16 %v123, %v122
    %vm128 = vcmask 261120
    %v130 = vsel %vm128, %v104, 0
    %132 = vmatprep.subr.bf16.mxu0 0
    %133 = vmatpush1.bf16.msra.mxu0 %v124
    %134 = vmatprep.subr.bf16.mxu0 0
    %135 = vmatpush1.bf16.msra.mxu0 %v125
    %136 = vmatprep.subr.bf16.mxu0 0
    %137 = vmatpush1.bf16.msra.mxu0 0
    %138 = vmatprep.subr.bf16.mxu0 0
    %139 = vmatpush1.bf16.msra.mxu0 0
    %140 = vmatprep.subr.bf16.mxu0 0
    %141 = vmatpush1.bf16.msra.mxu0 0
    %142 = vmatprep.subr.bf16.mxu0 0
    %143 = vmatpush1.bf16.msra.mxu0 0
    %144 = vmatprep.subr.bf16.mxu0 0
    %145 = vmatpush1.bf16.msra.mxu0 0
    %146 = vmatprep.subr.bf16.mxu0 0
    %147 = vmatpush1.bf16.msra.mxu0 0
    %148 = vmatprep.subr.bf16.mxu0 0
    %149 = vmatpush1.bf16.msra.mxu0 0
    %150 = vmatprep.subr.bf16.mxu0 0
    %151 = vmatpush1.bf16.msra.mxu0 0
    %152 = vmatprep.subr.bf16.mxu0 0
    %153 = vmatpush1.bf16.msra.mxu0 0
    %154 = vmatprep.subr.bf16.mxu0 0
    %155 = vmatpush1.bf16.msra.mxu0 0
    %156 = vmatprep.subr.bf16.mxu0 0
    %157 = vmatpush1.bf16.msra.mxu0 0
    %158 = vmatprep.subr.bf16.mxu0 0
    %159 = vmatpush1.bf16.msra.mxu0 0
    %160 = vmatprep.subr.bf16.mxu0 0
    %161 = vmatpush1.bf16.msra.mxu0 0
    %162 = vmatprep.subr.bf16.mxu0 0
    %163 = vmatpush1.bf16.msra.mxu0 0
    %164 = vmatprep.mubr.bf16.mxu0 0
    %165 = vmatmul.mubr.bf16.gmra.mrb[0].mxu0 %v130
    %v166 = vpop.f32.mrb[0].mxu0
    %v167 = vadd.f32 %v114, %v166
    %v168 = vpop.f32.mrb[0].mxu0
    %v169 = vpop.f32.mrb[0].mxu0
    %v170 = vpop.f32.mrb[0].mxu0
    %171 = vdwg.mxu0
    %v172 = vmax.f32 %v167, 0.0
    %v173 = vpack.c.bf16 %v172, %v172
    %v174 = vld [vmem:[%s5] sm:$0xf]
    %v175 = vld [vmem:[%s5 + $0x4] sm:$0xf]
    %v176 = vld [vmem:[%s5 + $0x8] sm:$0xf]
    %v177 = vld [vmem:[%s5 + $0xc] sm:$0xf]
    %v178 = vld [vmem:[%s6] sm:$0x1]
    %v180 = vlaneseq
    %v181 = vshrl.u32 %v180, 7
    %v182 = vsub.s32 0, %v181
    %v183 = vrot.slane %v178, %v182
    %v189 = vunpack.c.l.b16 %v174
    %v190 = vunpack.c.l.b16 %v175
    %v191 = vunpack.c.l.b16 %v176
    %v192 = vunpack.c.l.b16 %v177
    %v193 = vpack.c.b16 %v190, %v189
    %v194 = vpack.c.b16 %v192, %v191
    %v198 = vsel %vm128, %v173, 0
    %200 = vmatprep.subr.bf16.mxu0 0
    %201 = vmatpush1.bf16.msra.mxu0 %v193
    %202 = vmatprep.subr.bf16.mxu0 0
    %203 = vmatpush1.bf16.msra.mxu0 %v194
    %204 = vmatprep.subr.bf16.mxu0 0
    %205 = vmatpush1.bf16.msra.mxu0 0
    %206 = vmatprep.subr.bf16.mxu0 0
    %207 = vmatpush1.bf16.msra.mxu0 0
    %208 = vmatprep.subr.bf16.mxu0 0
    %209 = vmatpush1.bf16.msra.mxu0 0
    %210 = vmatprep.subr.bf16.mxu0 0
    %211 = vmatpush1.bf16.msra.mxu0 0
    %212 = vmatprep.subr.bf16.mxu0 0
    %213 = vmatpush1.bf16.msra.mxu0 0
    %214 = vmatprep.subr.bf16.mxu0 0
    %215 = vmatpush1.bf16.msra.mxu0 0
    %216 = vmatprep.subr.bf16.mxu0 0
    %217 = vmatpush1.bf16.msra.mxu0 0
    %218 = vmatprep.subr.bf16.mxu0 0
    %219 = vmatpush1.bf16.msra.mxu0 0
    %220 = vmatprep.subr.bf16.mxu0 0
    %221 = vmatpush1.bf16.msra.mxu0 0
    %222 = vmatprep.subr.bf16.mxu0 0
    %223 = vmatpush1.bf16.msra.mxu0 0
    %224 = vmatprep.subr.bf16.mxu0 0
    %225 = vmatpush1.bf16.msra.mxu0 0
    %226 = vmatprep.subr.bf16.mxu0 0
    %227 = vmatpush1.bf16.msra.mxu0 0
    %228 = vmatprep.subr.bf16.mxu0 0
    %229 = vmatpush1.bf16.msra.mxu0 0
    %230 = vmatprep.subr.bf16.mxu0 0
    %231 = vmatpush1.bf16.msra.mxu0 0
    %232 = vmatprep.mubr.bf16.mxu0 0
    %233 = vmatmul.mubr.bf16.gmra.mrb[0].mxu0 %v198
    %v234 = vpop.f32.mrb[0].mxu0
    %v235 = vadd.f32 %v183, %v234
    %v236 = vpop.f32.mrb[0].mxu0
    %v237 = vpop.f32.mrb[0].mxu0
    %v238 = vpop.f32.mrb[0].mxu0
    %239 = vdwg.mxu0
    %v240 = vtanh.pop %v235
    %v241 = vadd.f32 %v240, 2.0
    %vm242 = vcmask 64512
    %243 = vst.msk [vmem:[#allocation5] sm:$0xff] %vm242, %v241
    // Predicated region
    $region34: #{tpu_custom_call.1} parent=1 // pred_check
      _
    $region35: #{tpu_custom_call.1} parent=1 // pred_check_branch
      %245 = sbr.rel (0) target = $region37
    $region36: #{tpu_custom_call.1} parent=1 // pred_region
      %s247 = ssub.s32 128, 128
      %248 = vsyncadd [#allocation4], %s247
      %s250 = sshll.u32 [#allocation5], 4
      %s251 = int_to_ptr.vmem [resolvable:$true] %s250
      %253 = dma.vmem_to_hbm [thread:$0]  %s251, 128, %s7, [#allocation4]
    $region37: #{tpu_custom_call.1} parent=1 // pred_fallthru
      _
    // Predicated region
    $region38: #{tpu_custom_call.1} parent=1 // pred_check
      _
    $region39: #{tpu_custom_call.1} parent=1 // pred_check_branch
      %255 = sbr.rel (0) target = $region41
    $region40: #{tpu_custom_call.1} parent=1 // pred_region
      %256 = dma.done [#allocation4], 128
    $region41: #{tpu_custom_call.1} parent=1 // pred_fallthru
      _
    %257 = vsyncpa [#allocation3], 1
    %258 = vsyncpa [#allocation4], 1

</llo_original>
